<compile_context>
chip_gen: v7x
topology: tpu7x:2x2x1
jax: 0.10.0
libtpu: 0.0.40
codegen_flags: <defaults>
</compile_context>

<pallas_src>
import functools

import jax
import jax.numpy as jnp
from jax.experimental import pallas as pl
from jax.experimental.pallas import tpu as pltpu


def _round_up(n, m):
    return ((n + m - 1) // m) * m


def _bf16_vpu_ok():
    """True on chips whose VPUs handle bf16 natively (v6e / v7x)."""
    try:
        kind = jax.devices()[0].device_kind.lower()
    except Exception:
        return False
    return ("v6" in kind) or ("v7" in kind)


def fc_kernel(x_ref,
              w1_ref, b1_ref,
              w2_ref, b2_ref,
              w3_ref, b3_ref,
              w4_ref, b4_ref,
              w5_ref, b5_ref,
              w6_ref, b6_ref,
              o_ref,
              *, act_dtype):
    """Fused 6-Linear forward for one batch tile. Everything VMEM-resident."""

    def layer(h, w_ref, b_ref, relu, out_dtype):
        # bf16 operands into the MXU, f32 accumulation, f32 bias/ReLU on VPU,
        # then cast the carried activation to act_dtype (bf16 on v6e/v7x).
        y = jnp.dot(h.astype(jnp.bfloat16), w_ref[...],
                    preferred_element_type=jnp.float32)
        y = y + b_ref[...]
        if relu:
            y = jnp.maximum(y, 0.0)
        return y.astype(out_dtype)

    h = x_ref[...]                                   # already bf16 from wrapper
    h = layer(h, w1_ref, b1_ref, True, act_dtype)
    h = layer(h, w2_ref, b2_ref, True, act_dtype)
    h = layer(h, w3_ref, b3_ref, True, act_dtype)
    h = layer(h, w4_ref, b4_ref, True, act_dtype)
    h = layer(h, w5_ref, b5_ref, True, act_dtype)
    h = layer(h, w6_ref, b6_ref, False, o_ref.dtype)  # final Linear, no ReLU
    o_ref[...] = h


def _pick_bm(batch, block_m):
    """Batch tile: as large as possible (<= block_m), multiple of 8 sublanes,
    but keep >= 2 grid steps when the batch is big enough that each tile still
    has >= 256 rows (v7x 2-TC sharding; full MXU M-occupancy on v6e/v7x)."""
    batch_pad8 = _round_up(max(batch, 1), 8)
    bm = min(block_m, batch_pad8)
    if batch_pad8 >= 512:
        bm = min(bm, _round_up(pl.cdiv(batch_pad8, 2), 8))
    return max(bm, 8)


def fc_forward(x, params, *, block_m=512):
    """x: (batch, input_dim). params: list of (W (in,out), b (1,out)) in f32."""
    batch, in_dim = x.shape
    out_dim = params[-1][0].shape[1]
    n_layers = len(params)

    # Lane-dense padding of the (100-wide) input/output feature dims.
    in_pad = _round_up(in_dim, 128)
    out_pad = _round_up(out_dim, 128)

    bm = _pick_bm(batch, block_m)
    batch_pad = _round_up(batch, bm)

    # bf16 input tile: halves activation DMA; MXU gets bf16 anyway.
    x_p = jnp.zeros((batch_pad, in_pad), jnp.bfloat16).at[:batch, :in_dim].set(
        x.astype(jnp.bfloat16))

    # Zero-pad W1 rows, W6 cols and b6 lanes so padded lanes contribute 0.
    padded = []
    for li, (w, b) in enumerate(params):
        fi, fo = w.shape
        fi_p = in_pad if li == 0 else fi
        fo_p = out_pad if li == n_layers - 1 else fo
        w_p = jnp.zeros((fi_p, fo_p), jnp.bfloat16).at[:fi, :fo].set(
            w.astype(jnp.bfloat16))
        b_p = jnp.zeros((1, fo_p), jnp.float32).at[:, :fo].set(
            b.astype(jnp.float32))
        padded.append((w_p, b_p))

    flat_params = []
    in_specs = [pl.BlockSpec((bm, in_pad), lambda i: (i, 0))]
    for w_p, b_p in padded:
        flat_params.append(w_p)
        in_specs.append(pl.BlockSpec(w_p.shape, lambda i: (0, 0)))  # resident
        flat_params.append(b_p)
        in_specs.append(pl.BlockSpec(b_p.shape, lambda i: (0, 0)))  # resident

    # Advisory cost estimate (small-batch path is overhead/DMA bound).
    flops = 0
    bytes_accessed = (x_p.size * x_p.dtype.itemsize
                      + batch_pad * out_pad * jnp.dtype(x.dtype).itemsize)
    for w_p, b_p in padded:
        flops += 2 * batch_pad * w_p.shape[0] * w_p.shape[1]
        bytes_accessed += w_p.size * 2 + b_p.size * 4

    act_dtype = jnp.bfloat16 if _bf16_vpu_ok() else jnp.float32

    out = pl.pallas_call(
        functools.partial(fc_kernel, act_dtype=act_dtype),
        out_shape=jax.ShapeDtypeStruct((batch_pad, out_pad), x.dtype),
        grid=(batch_pad // bm,),
        in_specs=in_specs,
        out_specs=pl.BlockSpec((bm, out_pad), lambda i: (i, 0)),
        compiler_params=pltpu.CompilerParams(
            dimension_semantics=("parallel",)),
        cost_estimate=pl.CostEstimate(
            flops=flops, transcendentals=0, bytes_accessed=bytes_accessed),
    )(x_p, *flat_params)

    return out[:batch, :out_dim]


def init_params(key, input_dim=100, hidden_dim=128, output_dim=100,
                dtype=jnp.float32):
    """PyTorch-style init (uniform +/- 1/sqrt(fan_in)); weights stored (in, out)."""
    dims = [
        (input_dim, hidden_dim),
        (hidden_dim, hidden_dim * 2),
        (hidden_dim * 2, hidden_dim * 2),
        (hidden_dim * 2, hidden_dim * 2),
        (hidden_dim * 2, hidden_dim),
        (hidden_dim, output_dim),
    ]
    params = []
    for fan_in, fan_out in dims:
        key, kw, kb = jax.random.split(key, 3)
        bound = 1.0 / jnp.sqrt(jnp.asarray(fan_in, jnp.float32))
        w = jax.random.uniform(kw, (fan_in, fan_out), dtype, -bound, bound)
        b = jax.random.uniform(kb, (1, fan_out), dtype, -bound, bound)
        params.append((w, b))
    return params


def fc_reference_bf16(x, params):
    """Plain-JAX reference matching the kernel's bf16-operand / f32-accum math.
    (ReLU in f32 then bf16-cast before the next dot == kernel on all chips.)"""
    h = x.astype(jnp.bfloat16)
    for i, (w, b) in enumerate(params):
        h = jnp.dot(h.astype(jnp.bfloat16), w.astype(jnp.bfloat16),
                    preferred_element_type=jnp.float32) + b.astype(jnp.float32)
        if i < len(params) - 1:
            h = jnp.maximum(h, 0.0)
    return h


def fc_reference_f32(x, params):
    """Full-precision reference (original module semantics)."""
    h = x
    for i, (w, b) in enumerate(params):
        h = h @ w + b
        if i < len(params) - 1:
            h = jnp.maximum(h, 0.0)
    return h


if __name__ == "__main__":
    key = jax.random.PRNGKey(0)
    kx, kp = jax.random.split(key)

    input_dim, hidden_dim, output_dim = 100, 128, 100
    batch = 8

    x = jax.random.normal(kx, (batch, input_dim), jnp.float32)
    params = init_params(kp, input_dim, hidden_dim, output_dim)

    out = fc_forward(x, params)
    out = jax.block_until_ready(out)
    assert out.shape == (batch, output_dim), out.shape

    # Exact-math check against a reference doing the same bf16 casts.
    ref_bf16 = fc_reference_bf16(x, params)
    err = float(jnp.max(jnp.abs(out - ref_bf16)))
    assert err < 2e-3, err

    # Loose semantic check against the full-precision module forward.
    ref_f32 = fc_reference_f32(x, params)
    scale = float(jnp.max(jnp.abs(ref_f32)))
    err32 = float(jnp.max(jnp.abs(out - ref_f32)))
    assert err32 < 0.1 * scale + 1e-2, (err32, scale)

    # Exercise the multi-tile batch grid path (batch=1000 -> bm=504, grid=(2,)
    # with 8 padded rows sliced off), which also feeds both v7x TensorCores.
    xb = jax.random.normal(jax.random.PRNGKey(1), (1000, input_dim), jnp.float32)
    outb = jax.block_until_ready(fc_forward(xb, params))
    assert outb.shape == (1000, output_dim), outb.shape
    refb = fc_reference_bf16(xb, params)
    assert float(jnp.max(jnp.abs(outb - refb))) < 2e-3

    print("KERNEL_OK")
</pallas_src>

<mosaic_0001>
module attributes {stable_mosaic.version = 11 : i64} {
  func.func @fc_kernel(%arg0: i32, %arg1: memref<8x128xbf16, #tpu.memory_space<vmem>>, %arg2: memref<128x128xbf16, #tpu.memory_space<vmem>>, %arg3: memref<1x128xf32, #tpu.memory_space<vmem>>, %arg4: memref<128x256xbf16, #tpu.memory_space<vmem>>, %arg5: memref<1x256xf32, #tpu.memory_space<vmem>>, %arg6: memref<256x256xbf16, #tpu.memory_space<vmem>>, %arg7: memref<1x256xf32, #tpu.memory_space<vmem>>, %arg8: memref<256x256xbf16, #tpu.memory_space<vmem>>, %arg9: memref<1x256xf32, #tpu.memory_space<vmem>>, %arg10: memref<256x128xbf16, #tpu.memory_space<vmem>>, %arg11: memref<1x128xf32, #tpu.memory_space<vmem>>, %arg12: memref<128x128xbf16, #tpu.memory_space<vmem>>, %arg13: memref<1x128xf32, #tpu.memory_space<vmem>>, %arg14: memref<8x128xf32, #tpu.memory_space<vmem>>) attributes {dimension_semantics = [#tpu.dimension_semantics<parallel>], iteration_bounds = array<i64: 1>, scalar_prefetch = 0 : i64, scratch_operands = 0 : i64, tpu.core_type = #tpu.core_type<tc>, window_params = [{transform_indices = @transform_0, window_bounds = array<i64: 8, 128>}, {pipeline_mode = #tpu.pipeline_mode<synchronous>, transform_indices = @transform_1, window_bounds = array<i64: 128, 128>}, {pipeline_mode = #tpu.pipeline_mode<synchronous>, transform_indices = @transform_2, window_bounds = array<i64: 1, 128>}, {pipeline_mode = #tpu.pipeline_mode<synchronous>, transform_indices = @transform_3, window_bounds = array<i64: 128, 256>}, {pipeline_mode = #tpu.pipeline_mode<synchronous>, transform_indices = @transform_4, window_bounds = array<i64: 1, 256>}, {pipeline_mode = #tpu.pipeline_mode<synchronous>, transform_indices = @transform_5, window_bounds = array<i64: 256, 256>}, {pipeline_mode = #tpu.pipeline_mode<synchronous>, transform_indices = @transform_6, window_bounds = array<i64: 1, 256>}, {pipeline_mode = #tpu.pipeline_mode<synchronous>, transform_indices = @transform_7, window_bounds = array<i64: 256, 256>}, {pipeline_mode = #tpu.pipeline_mode<synchronous>, transform_indices = @transform_8, window_bounds = array<i64: 1, 256>}, {pipeline_mode = #tpu.pipeline_mode<synchronous>, transform_indices = @transform_9, window_bounds = array<i64: 256, 128>}, {pipeline_mode = #tpu.pipeline_mode<synchronous>, transform_indices = @transform_10, window_bounds = array<i64: 1, 128>}, {pipeline_mode = #tpu.pipeline_mode<synchronous>, transform_indices = @transform_11, window_bounds = array<i64: 128, 128>}, {pipeline_mode = #tpu.pipeline_mode<synchronous>, transform_indices = @transform_12, window_bounds = array<i64: 1, 128>}, {transform_indices = @transform_13, window_bounds = array<i64: 8, 128>}]} {
    %c0 = arith.constant 0 : index
    %c0_0 = arith.constant 0 : index
    %0 = vector.load %arg1[%c0, %c0_0] : memref<8x128xbf16, #tpu.memory_space<vmem>>, vector<8x128xbf16>
    %c0_1 = arith.constant 0 : index
    %c0_2 = arith.constant 0 : index
    %1 = vector.load %arg2[%c0_1, %c0_2] : memref<128x128xbf16, #tpu.memory_space<vmem>>, vector<128x128xbf16>
    %cst = arith.constant dense<0.000000e+00> : vector<8x128xf32>
    %2 = tpu.matmul %0, %1, %cst {dimension_numbers = #tpu.dot_dimension_numbers<[1], [0], [0], [1], [0, 0, 1, 1], [], []>} : vector<8x128xbf16>, vector<128x128xbf16>, vector<8x128xf32> -> vector<8x128xf32>
    %c0_3 = arith.constant 0 : index
    %c0_4 = arith.constant 0 : index
    %3 = vector.load %arg3[%c0_3, %c0_4] : memref<1x128xf32, #tpu.memory_space<vmem>>, vector<1x128xf32>
    %4 = vector.broadcast %3 : vector<1x128xf32> to vector<8x128xf32>
    %5 = arith.addf %2, %4 : vector<8x128xf32>
    %cst_5 = arith.constant 0.000000e+00 : f32
    %6 = vector.broadcast %cst_5 : f32 to vector<8x128xf32>
    %7 = arith.maximumf %5, %6 : vector<8x128xf32>
    %8 = arith.truncf %7 : vector<8x128xf32> to vector<8x128xbf16>
    %c0_6 = arith.constant 0 : index
    %c0_7 = arith.constant 0 : index
    %9 = vector.load %arg4[%c0_6, %c0_7] : memref<128x256xbf16, #tpu.memory_space<vmem>>, vector<128x256xbf16>
    %cst_8 = arith.constant dense<0.000000e+00> : vector<8x256xf32>
    %10 = tpu.matmul %8, %9, %cst_8 {dimension_numbers = #tpu.dot_dimension_numbers<[1], [0], [0], [1], [0, 0, 1, 1], [], []>} : vector<8x128xbf16>, vector<128x256xbf16>, vector<8x256xf32> -> vector<8x256xf32>
    %c0_9 = arith.constant 0 : index
    %c0_10 = arith.constant 0 : index
    %11 = vector.load %arg5[%c0_9, %c0_10] : memref<1x256xf32, #tpu.memory_space<vmem>>, vector<1x256xf32>
    %12 = vector.broadcast %11 : vector<1x256xf32> to vector<8x256xf32>
    %13 = arith.addf %10, %12 : vector<8x256xf32>
    %cst_11 = arith.constant 0.000000e+00 : f32
    %14 = vector.broadcast %cst_11 : f32 to vector<8x256xf32>
    %15 = arith.maximumf %13, %14 : vector<8x256xf32>
    %16 = arith.truncf %15 : vector<8x256xf32> to vector<8x256xbf16>
    %c0_12 = arith.constant 0 : index
    %c0_13 = arith.constant 0 : index
    %17 = vector.load %arg6[%c0_12, %c0_13] : memref<256x256xbf16, #tpu.memory_space<vmem>>, vector<256x256xbf16>
    %cst_14 = arith.constant dense<0.000000e+00> : vector<8x256xf32>
    %18 = tpu.matmul %16, %17, %cst_14 {dimension_numbers = #tpu.dot_dimension_numbers<[1], [0], [0], [1], [0, 0, 1, 1], [], []>} : vector<8x256xbf16>, vector<256x256xbf16>, vector<8x256xf32> -> vector<8x256xf32>
    %c0_15 = arith.constant 0 : index
    %c0_16 = arith.constant 0 : index
    %19 = vector.load %arg7[%c0_15, %c0_16] : memref<1x256xf32, #tpu.memory_space<vmem>>, vector<1x256xf32>
    %20 = vector.broadcast %19 : vector<1x256xf32> to vector<8x256xf32>
    %21 = arith.addf %18, %20 : vector<8x256xf32>
    %cst_17 = arith.constant 0.000000e+00 : f32
    %22 = vector.broadcast %cst_17 : f32 to vector<8x256xf32>
    %23 = arith.maximumf %21, %22 : vector<8x256xf32>
    %24 = arith.truncf %23 : vector<8x256xf32> to vector<8x256xbf16>
    %c0_18 = arith.constant 0 : index
    %c0_19 = arith.constant 0 : index
    %25 = vector.load %arg8[%c0_18, %c0_19] : memref<256x256xbf16, #tpu.memory_space<vmem>>, vector<256x256xbf16>
    %cst_20 = arith.constant dense<0.000000e+00> : vector<8x256xf32>
    %26 = tpu.matmul %24, %25, %cst_20 {dimension_numbers = #tpu.dot_dimension_numbers<[1], [0], [0], [1], [0, 0, 1, 1], [], []>} : vector<8x256xbf16>, vector<256x256xbf16>, vector<8x256xf32> -> vector<8x256xf32>
    %c0_21 = arith.constant 0 : index
    %c0_22 = arith.constant 0 : index
    %27 = vector.load %arg9[%c0_21, %c0_22] : memref<1x256xf32, #tpu.memory_space<vmem>>, vector<1x256xf32>
    %28 = vector.broadcast %27 : vector<1x256xf32> to vector<8x256xf32>
    %29 = arith.addf %26, %28 : vector<8x256xf32>
    %cst_23 = arith.constant 0.000000e+00 : f32
    %30 = vector.broadcast %cst_23 : f32 to vector<8x256xf32>
    %31 = arith.maximumf %29, %30 : vector<8x256xf32>
    %32 = arith.truncf %31 : vector<8x256xf32> to vector<8x256xbf16>
    %c0_24 = arith.constant 0 : index
    %c0_25 = arith.constant 0 : index
    %33 = vector.load %arg10[%c0_24, %c0_25] : memref<256x128xbf16, #tpu.memory_space<vmem>>, vector<256x128xbf16>
    %cst_26 = arith.constant dense<0.000000e+00> : vector<8x128xf32>
    %34 = tpu.matmul %32, %33, %cst_26 {dimension_numbers = #tpu.dot_dimension_numbers<[1], [0], [0], [1], [0, 0, 1, 1], [], []>} : vector<8x256xbf16>, vector<256x128xbf16>, vector<8x128xf32> -> vector<8x128xf32>
    %c0_27 = arith.constant 0 : index
    %c0_28 = arith.constant 0 : index
    %35 = vector.load %arg11[%c0_27, %c0_28] : memref<1x128xf32, #tpu.memory_space<vmem>>, vector<1x128xf32>
    %36 = vector.broadcast %35 : vector<1x128xf32> to vector<8x128xf32>
    %37 = arith.addf %34, %36 : vector<8x128xf32>
    %cst_29 = arith.constant 0.000000e+00 : f32
    %38 = vector.broadcast %cst_29 : f32 to vector<8x128xf32>
    %39 = arith.maximumf %37, %38 : vector<8x128xf32>
    %40 = arith.truncf %39 : vector<8x128xf32> to vector<8x128xbf16>
    %c0_30 = arith.constant 0 : index
    %c0_31 = arith.constant 0 : index
    %41 = vector.load %arg12[%c0_30, %c0_31] : memref<128x128xbf16, #tpu.memory_space<vmem>>, vector<128x128xbf16>
    %cst_32 = arith.constant dense<0.000000e+00> : vector<8x128xf32>
    %42 = tpu.matmul %40, %41, %cst_32 {dimension_numbers = #tpu.dot_dimension_numbers<[1], [0], [0], [1], [0, 0, 1, 1], [], []>} : vector<8x128xbf16>, vector<128x128xbf16>, vector<8x128xf32> -> vector<8x128xf32>
    %c0_33 = arith.constant 0 : index
    %c0_34 = arith.constant 0 : index
    %43 = vector.load %arg13[%c0_33, %c0_34] : memref<1x128xf32, #tpu.memory_space<vmem>>, vector<1x128xf32>
    %44 = vector.broadcast %43 : vector<1x128xf32> to vector<8x128xf32>
    %45 = arith.addf %42, %44 : vector<8x128xf32>
    %c0_35 = arith.constant 0 : index
    %c0_36 = arith.constant 0 : index
    %46 = vector.load %arg14[%c0_35, %c0_36] : memref<8x128xf32, #tpu.memory_space<vmem>>, vector<8x128xf32>
    tpu.vector_store %arg14[%c0_35, %c0_36], %45 {strides = array<i32>} : memref<8x128xf32, #tpu.memory_space<vmem>>, vector<8x128xf32>,
    return
  }
  func.func @transform_0(%arg0: i32) -> (i32, i32) {
    %c0_i32 = arith.constant 0 : i32
    %c0_i32_0 = arith.constant 0 : i32
    return %arg0, %c0_i32 : i32, i32
  }
  func.func @transform_1(%arg0: i32) -> (i32, i32) {
    %c0_i32 = arith.constant 0 : i32
    %c0_i32_0 = arith.constant 0 : i32
    %c0_i32_1 = arith.constant 0 : i32
    return %c0_i32, %c0_i32_0 : i32, i32
  }
  func.func @transform_2(%arg0: i32) -> (i32, i32) {
    %c0_i32 = arith.constant 0 : i32
    %c0_i32_0 = arith.constant 0 : i32
    %c0_i32_1 = arith.constant 0 : i32
    return %c0_i32, %c0_i32_0 : i32, i32
  }
  func.func @transform_3(%arg0: i32) -> (i32, i32) {
    %c0_i32 = arith.constant 0 : i32
    %c0_i32_0 = arith.constant 0 : i32
    %c0_i32_1 = arith.constant 0 : i32
    return %c0_i32, %c0_i32_0 : i32, i32
  }
  func.func @transform_4(%arg0: i32) -> (i32, i32) {
    %c0_i32 = arith.constant 0 : i32
    %c0_i32_0 = arith.constant 0 : i32
    %c0_i32_1 = arith.constant 0 : i32
    return %c0_i32, %c0_i32_0 : i32, i32
  }
  func.func @transform_5(%arg0: i32) -> (i32, i32) {
    %c0_i32 = arith.constant 0 : i32
    %c0_i32_0 = arith.constant 0 : i32
    %c0_i32_1 = arith.constant 0 : i32
    return %c0_i32, %c0_i32_0 : i32, i32
  }
  func.func @transform_6(%arg0: i32) -> (i32, i32) {
    %c0_i32 = arith.constant 0 : i32
    %c0_i32_0 = arith.constant 0 : i32
    %c0_i32_1 = arith.constant 0 : i32
    return %c0_i32, %c0_i32_0 : i32, i32
  }
  func.func @transform_7(%arg0: i32) -> (i32, i32) {
    %c0_i32 = arith.constant 0 : i32
    %c0_i32_0 = arith.constant 0 : i32
    %c0_i32_1 = arith.constant 0 : i32
    return %c0_i32, %c0_i32_0 : i32, i32
  }
  func.func @transform_8(%arg0: i32) -> (i32, i32) {
    %c0_i32 = arith.constant 0 : i32
    %c0_i32_0 = arith.constant 0 : i32
    %c0_i32_1 = arith.constant 0 : i32
    return %c0_i32, %c0_i32_0 : i32, i32
  }
  func.func @transform_9(%arg0: i32) -> (i32, i32) {
    %c0_i32 = arith.constant 0 : i32
    %c0_i32_0 = arith.constant 0 : i32
    %c0_i32_1 = arith.constant 0 : i32
    return %c0_i32, %c0_i32_0 : i32, i32
  }
  func.func @transform_10(%arg0: i32) -> (i32, i32) {
    %c0_i32 = arith.constant 0 : i32
    %c0_i32_0 = arith.constant 0 : i32
    %c0_i32_1 = arith.constant 0 : i32
    return %c0_i32, %c0_i32_0 : i32, i32
  }
  func.func @transform_11(%arg0: i32) -> (i32, i32) {
    %c0_i32 = arith.constant 0 : i32
    %c0_i32_0 = arith.constant 0 : i32
    %c0_i32_1 = arith.constant 0 : i32
    return %c0_i32, %c0_i32_0 : i32, i32
  }
  func.func @transform_12(%arg0: i32) -> (i32, i32) {
    %c0_i32 = arith.constant 0 : i32
    %c0_i32_0 = arith.constant 0 : i32
    %c0_i32_1 = arith.constant 0 : i32
    return %c0_i32, %c0_i32_0 : i32, i32
  }
  func.func @transform_13(%arg0: i32) -> (i32, i32) {
    %c0_i32 = arith.constant 0 : i32
    %c0_i32_0 = arith.constant 0 : i32
    return %arg0, %c0_i32 : i32, i32
  }
}

</mosaic_0001>

<llo_original>
// kernel: tpu_custom_call.1
$region0: #{tpu_custom_call.1}
  #allocation0 [shape = 'u32[]', space=smem, size = 0x4, offset = 0x4, fixed_abs, tag = 'smem constant byte address 0x4 - core index']
  #allocation1 [shape = 'u32[144,128]{1,0:T(1,128)}', space=vmem, size = 0x12000, scoped, tag = 'internal scratch']
  %s0 = inlined_call_operand.hbm [shape: bf16[8,128], index: 0, kind: input, shape index: {}]
  %s1 = inlined_call_operand.hbm [shape: bf16[128,128], index: 1, kind: input, shape index: {}]
  %s2 = inlined_call_operand.vmem [shape: f32[1,128], index: 2, kind: input, shape index: {}]
  %s3 = inlined_call_operand.hbm [shape: bf16[128,256], index: 3, kind: input, shape index: {}]
  %s4 = inlined_call_operand.vmem [shape: f32[1,256], index: 4, kind: input, shape index: {}]
  %s5 = inlined_call_operand.hbm [shape: bf16[256,256], index: 5, kind: input, shape index: {}]
  %s6 = inlined_call_operand.vmem [shape: f32[1,256], index: 6, kind: input, shape index: {}]
  %s7 = inlined_call_operand.hbm [shape: bf16[256,256], index: 7, kind: input, shape index: {}]
  %s8 = inlined_call_operand.vmem [shape: f32[1,256], index: 8, kind: input, shape index: {}]
  %s9 = inlined_call_operand.hbm [shape: bf16[256,128], index: 9, kind: input, shape index: {}]
  %s10 = inlined_call_operand.vmem [shape: f32[1,128], index: 10, kind: input, shape index: {}]
  %s11 = inlined_call_operand.hbm [shape: bf16[128,128], index: 11, kind: input, shape index: {}]
  %s12 = inlined_call_operand.vmem [shape: f32[1,128], index: 12, kind: input, shape index: {}]
  %s13 = inlined_call_operand.hbm [shape: f32[8,128], index: 13, kind: output, shape index: {}]
  %s14 = sld [smem:[#allocation0]]
  $region90: #{tpu_custom_call.1} parent=0
    _
  %s16 = ssub.s32 1, %s14
  %s17 = scalar_select 0, %s16, %s14
  $region1: #{tpu_custom_call.1} parent=0
    #allocation2 [shape = 'u8[2048]{0}', space=vmem, size = 0x800, scoped, tag = 'input window, operand 0, single buffered']
    #allocation3 [shape = 's32[1]{0}', space=sflag, size = 0x4, scoped, tag = 'scoped memory for tpu_custom_call.1']
    #allocation4 [shape = 's32[1]{0}', space=sflag, size = 0x4, scoped, tag = 'scoped memory for tpu_custom_call.1']
    #allocation5 [shape = 'u8[32768]{0}', space=vmem, size = 0x8000, scoped, tag = 'input window, operand 1, single buffered']
    #allocation6 [shape = 's32[1]{0}', space=sflag, size = 0x4, scoped, tag = 'scoped memory for tpu_custom_call.1']
    #allocation7 [shape = 'u8[65536]{0}', space=vmem, size = 0x10000, scoped, tag = 'input window, operand 3, single buffered']
    #allocation8 [shape = 'u8[131072]{0}', space=vmem, size = 0x20000, scoped, tag = 'input window, operand 5, single buffered']
    #allocation9 [shape = 's32[1]{0}', space=sflag, size = 0x4, scoped, tag = 'scoped memory for tpu_custom_call.1']
    #allocation10 [shape = 'u8[131072]{0}', space=vmem, size = 0x20000, scoped, tag = 'input window, operand 7, single buffered']
    #allocation11 [shape = 'u8[65536]{0}', space=vmem, size = 0x10000, scoped, tag = 'input window, operand 9, single buffered']
    #allocation12 [shape = 's32[1]{0}', space=sflag, size = 0x4, scoped, tag = 'scoped memory for tpu_custom_call.1']
    #allocation13 [shape = 'u8[32768]{0}', space=vmem, size = 0x8000, scoped, tag = 'input window, operand 11, single buffered']
    #allocation14 [shape = 'u8[4096]{0}', space=vmem, size = 0x1000, scoped, tag = 'output window, operand 0, single buffered']
    %18 = vsyncpa [#allocation3], 0
    %19 = vsyncpa [#allocation6], 0
    %20 = vsyncpa [#allocation9], 0
    %21 = vsyncpa [#allocation12], 0
    %22 = vsyncpa [#allocation4], 0
    // Predicated region
    $region2: #{tpu_custom_call.1} parent=1 // pred_check
      _
    $region3: #{tpu_custom_call.1} parent=1 // pred_check_branch
      %24 = sbr.rel (0) target = $region5
    $region4: #{tpu_custom_call.1} parent=1 // pred_region
      %s26 = ssub.s32 64, 64
      %27 = vsyncadd [#allocation3], %s26
      %s29 = sshll.u32 [#allocation2], 4
      %s30 = int_to_ptr.vmem [resolvable:$true] %s29
      %32 = dma.hbm_to_vmem [thread:$0]  %s0, 64, %s30, [#allocation3]
    $region5: #{tpu_custom_call.1} parent=1 // pred_fallthru
      _
    // Predicated region
    $region6: #{tpu_custom_call.1} parent=1 // pred_check
      _
    $region7: #{tpu_custom_call.1} parent=1 // pred_check_branch
      %34 = sbr.rel (0) target = $region9
    $region8: #{tpu_custom_call.1} parent=1 // pred_region
      %s36 = ssub.s32 1024, 1024
      %37 = vsyncadd [#allocation6], %s36
      %s38 = sshll.u32 [#allocation5], 4
      %s39 = int_to_ptr.vmem [resolvable:$true] %s38
      %44 = dma.hbm_to_vmem [thread:$0]  %s1, 1024, %s39, [#allocation6], 64, 64, 4
    $region9: #{tpu_custom_call.1} parent=1 // pred_fallthru
      _
    // Predicated region
    $region10: #{tpu_custom_call.1} parent=1 // pred_check
      _
    $region11: #{tpu_custom_call.1} parent=1 // pred_check_branch
      %46 = sbr.rel (0) target = $region13
    $region12: #{tpu_custom_call.1} parent=1 // pred_region
      _
    $region13: #{tpu_custom_call.1} parent=1 // pred_fallthru
      _
    // Predicated region
    $region14: #{tpu_custom_call.1} parent=1 // pred_check
      _
    $region15: #{tpu_custom_call.1} parent=1 // pred_check_branch
      %48 = sbr.rel (0) target = $region17
    $region16: #{tpu_custom_call.1} parent=1 // pred_region
      %s50 = ssub.s32 2048, 2048
      %51 = vsyncadd [#allocation6], %s50
      %s52 = sshll.u32 [#allocation7], 4
      %s53 = int_to_ptr.vmem [resolvable:$true] %s52
      %58 = dma.hbm_to_vmem [thread:$0]  %s3, 2048, %s53, [#allocation6], 128, 128, 8
    $region17: #{tpu_custom_call.1} parent=1 // pred_fallthru
      _
    // Predicated region
    $region18: #{tpu_custom_call.1} parent=1 // pred_check
      _
    $region19: #{tpu_custom_call.1} parent=1 // pred_check_branch
      %60 = sbr.rel (0) target = $region21
    $region20: #{tpu_custom_call.1} parent=1 // pred_region
      _
    $region21: #{tpu_custom_call.1} parent=1 // pred_fallthru
      _
    // Predicated region
    $region22: #{tpu_custom_call.1} parent=1 // pred_check
      _
    $region23: #{tpu_custom_call.1} parent=1 // pred_check_branch
      %62 = sbr.rel (0) target = $region25
    $region24: #{tpu_custom_call.1} parent=1 // pred_region
      %s64 = ssub.s32 4096, 4096
      %65 = vsyncadd [#allocation9], %s64
      %s66 = sshll.u32 [#allocation8], 4
      %s67 = int_to_ptr.vmem [resolvable:$true] %s66
      %72 = dma.hbm_to_vmem [thread:$0]  %s5, 4096, %s67, [#allocation9], 128, 128, 8
    $region25: #{tpu_custom_call.1} parent=1 // pred_fallthru
      _
    // Predicated region
    $region26: #{tpu_custom_call.1} parent=1 // pred_check
      _
    $region27: #{tpu_custom_call.1} parent=1 // pred_check_branch
      %74 = sbr.rel (0) target = $region29
    $region28: #{tpu_custom_call.1} parent=1 // pred_region
      _
    $region29: #{tpu_custom_call.1} parent=1 // pred_fallthru
      _
    // Predicated region
    $region30: #{tpu_custom_call.1} parent=1 // pred_check
      _
    $region31: #{tpu_custom_call.1} parent=1 // pred_check_branch
      %76 = sbr.rel (0) target = $region33
    $region32: #{tpu_custom_call.1} parent=1 // pred_region
      %s78 = ssub.s32 4096, 4096
      %79 = vsyncadd [#allocation9], %s78
      %s80 = sshll.u32 [#allocation10], 4
      %s81 = int_to_ptr.vmem [resolvable:$true] %s80
      %86 = dma.hbm_to_vmem [thread:$0]  %s7, 4096, %s81, [#allocation9], 128, 128, 8
    $region33: #{tpu_custom_call.1} parent=1 // pred_fallthru
      _
    // Predicated region
    $region34: #{tpu_custom_call.1} parent=1 // pred_check
      _
    $region35: #{tpu_custom_call.1} parent=1 // pred_check_branch
      %88 = sbr.rel (0) target = $region37
    $region36: #{tpu_custom_call.1} parent=1 // pred_region
      _
    $region37: #{tpu_custom_call.1} parent=1 // pred_fallthru
      _
    // Predicated region
    $region38: #{tpu_custom_call.1} parent=1 // pred_check
      _
    $region39: #{tpu_custom_call.1} parent=1 // pred_check_branch
      %90 = sbr.rel (0) target = $region41
    $region40: #{tpu_custom_call.1} parent=1 // pred_region
      %s92 = ssub.s32 2048, 2048
      %93 = vsyncadd [#allocation12], %s92
      %s94 = sshll.u32 [#allocation11], 4
      %s95 = int_to_ptr.vmem [resolvable:$true] %s94
      %100 = dma.hbm_to_vmem [thread:$0]  %s9, 2048, %s95, [#allocation12], 64, 64, 4
    $region41: #{tpu_custom_call.1} parent=1 // pred_fallthru
      _
    // Predicated region
    $region42: #{tpu_custom_call.1} parent=1 // pred_check
      _
    $region43: #{tpu_custom_call.1} parent=1 // pred_check_branch
      %102 = sbr.rel (0) target = $region45
    $region44: #{tpu_custom_call.1} parent=1 // pred_region
      _
    $region45: #{tpu_custom_call.1} parent=1 // pred_fallthru
      _
    // Predicated region
    $region46: #{tpu_custom_call.1} parent=1 // pred_check
      _
    $region47: #{tpu_custom_call.1} parent=1 // pred_check_branch
      %104 = sbr.rel (0) target = $region49
    $region48: #{tpu_custom_call.1} parent=1 // pred_region
      %s106 = ssub.s32 1024, 1024
      %107 = vsyncadd [#allocation12], %s106
      %s108 = sshll.u32 [#allocation13], 4
      %s109 = int_to_ptr.vmem [resolvable:$true] %s108
      %114 = dma.hbm_to_vmem [thread:$0]  %s11, 1024, %s109, [#allocation12], 64, 64, 4
    $region49: #{tpu_custom_call.1} parent=1 // pred_fallthru
      _
    // Predicated region
    $region50: #{tpu_custom_call.1} parent=1 // pred_check
      _
    $region51: #{tpu_custom_call.1} parent=1 // pred_check_branch
      %116 = sbr.rel (0) target = $region53
    $region52: #{tpu_custom_call.1} parent=1 // pred_region
      _
    $region53: #{tpu_custom_call.1} parent=1 // pred_fallthru
      _
    // Predicated region
    $region54: #{tpu_custom_call.1} parent=1 // pred_check
      _
    $region55: #{tpu_custom_call.1} parent=1 // pred_check_branch
      %118 = sbr.rel (0) target = $region57
    $region56: #{tpu_custom_call.1} parent=1 // pred_region
      %119 = dma.done [#allocation3], 64
    $region57: #{tpu_custom_call.1} parent=1 // pred_fallthru
      _
    // Predicated region
    $region58: #{tpu_custom_call.1} parent=1 // pred_check
      _
    $region59: #{tpu_custom_call.1} parent=1 // pred_check_branch
      %121 = sbr.rel (0) target = $region61
    $region60: #{tpu_custom_call.1} parent=1 // pred_region
      %122 = dma.done [#allocation6], 1024
    $region61: #{tpu_custom_call.1} parent=1 // pred_fallthru
      _
    // Predicated region
    $region62: #{tpu_custom_call.1} parent=1 // pred_check
      _
    $region63: #{tpu_custom_call.1} parent=1 // pred_check_branch
      %124 = sbr.rel (0) target = $region65
    $region64: #{tpu_custom_call.1} parent=1 // pred_region
      %125 = dma.done [#allocation6], 2048
    $region65: #{tpu_custom_call.1} parent=1 // pred_fallthru
      _
    // Predicated region
    $region66: #{tpu_custom_call.1} parent=1 // pred_check
      _
    $region67: #{tpu_custom_call.1} parent=1 // pred_check_branch
      %127 = sbr.rel (0) target = $region69
    $region68: #{tpu_custom_call.1} parent=1 // pred_region
      %128 = dma.done [#allocation9], 4096
    $region69: #{tpu_custom_call.1} parent=1 // pred_fallthru
      _
    // Predicated region
    $region70: #{tpu_custom_call.1} parent=1 // pred_check
      _
    $region71: #{tpu_custom_call.1} parent=1 // pred_check_branch
      %130 = sbr.rel (0) target = $region73
    $region72: #{tpu_custom_call.1} parent=1 // pred_region
      %131 = dma.done [#allocation9], 4096
    $region73: #{tpu_custom_call.1} parent=1 // pred_fallthru
      _
    // Predicated region
    $region74: #{tpu_custom_call.1} parent=1 // pred_check
      _
    $region75: #{tpu_custom_call.1} parent=1 // pred_check_branch
      %133 = sbr.rel (0) target = $region77
    $region76: #{tpu_custom_call.1} parent=1 // pred_region
      %134 = dma.done [#allocation12], 2048
    $region77: #{tpu_custom_call.1} parent=1 // pred_fallthru
      _
    // Predicated region
    $region78: #{tpu_custom_call.1} parent=1 // pred_check
      _
    $region79: #{tpu_custom_call.1} parent=1 // pred_check_branch
      %136 = sbr.rel (0) target = $region81
    $region80: #{tpu_custom_call.1} parent=1 // pred_region
      %137 = dma.done [#allocation12], 1024
    $region81: #{tpu_custom_call.1} parent=1 // pred_fallthru
      _
    %v139 = vld [vmem:[#allocation2] sm:$0xf]
    %v140 = vld [vmem:[#allocation5] sm:$0xf]
    %v141 = vld [vmem:[#allocation5 + $0x4] sm:$0xf]
    %v142 = vld [vmem:[#allocation5 + $0x8] sm:$0xf]
    %v143 = vld [vmem:[#allocation5 + $0xc] sm:$0xf]
    %v144 = vld [vmem:[#allocation5 + $0x10] sm:$0xf]
    %v145 = vld [vmem:[#allocation5 + $0x14] sm:$0xf]
    %v146 = vld [vmem:[#allocation5 + $0x18] sm:$0xf]
    %v147 = vld [vmem:[#allocation5 + $0x1c] sm:$0xf]
    %v148 = vld [vmem:[#allocation5 + $0x20] sm:$0xf]
    %v149 = vld [vmem:[#allocation5 + $0x24] sm:$0xf]
    %v150 = vld [vmem:[#allocation5 + $0x28] sm:$0xf]
    %v151 = vld [vmem:[#allocation5 + $0x2c] sm:$0xf]
    %v152 = vld [vmem:[#allocation5 + $0x30] sm:$0xf]
    %v153 = vld [vmem:[#allocation5 + $0x34] sm:$0xf]
    %v154 = vld [vmem:[#allocation5 + $0x38] sm:$0xf]
    %v155 = vld [vmem:[#allocation5 + $0x3c] sm:$0xf]
    %v156 = vld [vmem:[%s2] sm:$0x1]
    %v158 = vlaneseq
    %v159 = vshrl.u32 %v158, 7
    %v160 = vsub.s32 0, %v159
    %v161 = vrot.slane %v156, %v160
    %v179 = vunpack.c.l.b16 %v140
    %v180 = vunpack.c.l.b16 %v141
    %v181 = vunpack.c.l.b16 %v142
    %v182 = vunpack.c.l.b16 %v143
    %v183 = vunpack.c.l.b16 %v144
    %v184 = vunpack.c.l.b16 %v145
    %v185 = vunpack.c.l.b16 %v146
    %v186 = vunpack.c.l.b16 %v147
    %v187 = vunpack.c.l.b16 %v148
    %v188 = vunpack.c.l.b16 %v149
    %v189 = vunpack.c.l.b16 %v150
    %v190 = vunpack.c.l.b16 %v151
    %v191 = vunpack.c.l.b16 %v152
    %v192 = vunpack.c.l.b16 %v153
    %v193 = vunpack.c.l.b16 %v154
    %v194 = vunpack.c.l.b16 %v155
    %v195 = vpack.c.b16 %v180, %v179
    %v196 = vpack.c.b16 %v182, %v181
    %v197 = vpack.c.b16 %v184, %v183
    %v198 = vpack.c.b16 %v186, %v185
    %v199 = vpack.c.b16 %v188, %v187
    %v200 = vpack.c.b16 %v190, %v189
    %v201 = vpack.c.b16 %v192, %v191
    %v202 = vpack.c.b16 %v194, %v193
    %211 = vmatprep.subr.bf16.mxu0 0
    %212 = vmatpush1.bf16.msra.mxu0 %v195
    %213 = vmatprep.subr.bf16.mxu0 0
    %214 = vmatpush1.bf16.msra.mxu0 %v196
    %215 = vmatprep.subr.bf16.mxu0 0
    %216 = vmatpush1.bf16.msra.mxu0 %v197
    %217 = vmatprep.subr.bf16.mxu0 0
    %218 = vmatpush1.bf16.msra.mxu0 %v198
    %219 = vmatprep.subr.bf16.mxu0 0
    %220 = vmatpush1.bf16.msra.mxu0 %v199
    %221 = vmatprep.subr.bf16.mxu0 0
    %222 = vmatpush1.bf16.msra.mxu0 %v200
    %223 = vmatprep.subr.bf16.mxu0 0
    %224 = vmatpush1.bf16.msra.mxu0 %v201
    %225 = vmatprep.subr.bf16.mxu0 0
    %226 = vmatpush1.bf16.msra.mxu0 %v202
    %227 = vmatprep.subr.bf16.mxu0 0
    %228 = vmatpush1.bf16.msra.mxu0 0
    %229 = vmatprep.subr.bf16.mxu0 0
    %230 = vmatpush1.bf16.msra.mxu0 0
    %231 = vmatprep.subr.bf16.mxu0 0
    %232 = vmatpush1.bf16.msra.mxu0 0
    %233 = vmatprep.subr.bf16.mxu0 0
    %234 = vmatpush1.bf16.msra.mxu0 0
    %235 = vmatprep.subr.bf16.mxu0 0
    %236 = vmatpush1.bf16.msra.mxu0 0
    %237 = vmatprep.subr.bf16.mxu0 0
    %238 = vmatpush1.bf16.msra.mxu0 0
    %239 = vmatprep.subr.bf16.mxu0 0
    %240 = vmatpush1.bf16.msra.mxu0 0
    %241 = vmatprep.subr.bf16.mxu0 0
    %242 = vmatpush1.bf16.msra.mxu0 0
    %243 = vmatprep.mubr.bf16.mxu0 0
    %244 = vmatmul.mubr.bf16.gmra.mrb[0].mxu0 %v139
    %v245 = vpop.f32.mrb[0].mxu0
    %v246 = vadd.f32 %v161, %v245
    %v247 = vpop.f32.mrb[0].mxu0
    %v248 = vpop.f32.mrb[0].mxu0
    %v249 = vpop.f32.mrb[0].mxu0
    %250 = vdwg.mxu0
    %v251 = vmax.f32 %v246, 0.0
    %v252 = vpack.c.bf16 %v251, %v251
    %v253 = vld [vmem:[#allocation7] sm:$0xff]
    %v254 = vld [vmem:[#allocation7 + $0x8] sm:$0xff]
    %v255 = vld [vmem:[#allocation7 + $0x10] sm:$0xff]
    %v256 = vld [vmem:[#allocation7 + $0x18] sm:$0xff]
    %v257 = vld [vmem:[#allocation7 + $0x20] sm:$0xff]
    %v258 = vld [vmem:[#allocation7 + $0x28] sm:$0xff]
    %v259 = vld [vmem:[#allocation7 + $0x30] sm:$0xff]
    %v260 = vld [vmem:[#allocation7 + $0x38] sm:$0xff]
    %v261 = vld [vmem:[#allocation7 + $0x40] sm:$0xff]
    %v262 = vld [vmem:[#allocation7 + $0x48] sm:$0xff]
    %v263 = vld [vmem:[#allocation7 + $0x50] sm:$0xff]
    %v264 = vld [vmem:[#allocation7 + $0x58] sm:$0xff]
    %v265 = vld [vmem:[#allocation7 + $0x60] sm:$0xff]
    %v266 = vld [vmem:[#allocation7 + $0x68] sm:$0xff]
    %v267 = vld [vmem:[#allocation7 + $0x70] sm:$0xff]
    %v268 = vld [vmem:[#allocation7 + $0x78] sm:$0xff]
    %v269 = vld [vmem:[%s4] sm:$0x3]
    %v271 = vlaneseq
    %v272 = vshrl.u32 %v271, 7
    %v273 = vsub.s32 0, %v272
    %v274 = vrot.slane %v269, %v273
    %v275 = vlaneseq
    %v276 = vshrl.u32 %v275, 7
    %v277 = vsub.s32 1, %v276
    %v278 = vrot.slane %v269, %v277
    %v297 = vunpack.c.l.b16 %v253
    %v298 = vunpack.c.h.b16 %v253
    %v299 = vunpack.c.l.b16 %v254
    %v300 = vunpack.c.h.b16 %v254
    %v301 = vunpack.c.l.b16 %v255
    %v302 = vunpack.c.h.b16 %v255
    %v303 = vunpack.c.l.b16 %v256
    %v304 = vunpack.c.h.b16 %v256
    %v305 = vunpack.c.l.b16 %v257
    %v306 = vunpack.c.h.b16 %v257
    %v307 = vunpack.c.l.b16 %v258
    %v308 = vunpack.c.h.b16 %v258
    %v309 = vunpack.c.l.b16 %v259
    %v310 = vunpack.c.h.b16 %v259
    %v311 = vunpack.c.l.b16 %v260
    %v312 = vunpack.c.h.b16 %v260
    %v313 = vunpack.c.l.b16 %v261
    %v314 = vunpack.c.h.b16 %v261
    %v315 = vunpack.c.l.b16 %v262
    %v316 = vunpack.c.h.b16 %v262
    %v317 = vunpack.c.l.b16 %v263
    %v318 = vunpack.c.h.b16 %v263
    %v319 = vunpack.c.l.b16 %v264
    %v320 = vunpack.c.h.b16 %v264
    %v321 = vunpack.c.l.b16 %v265
    %v322 = vunpack.c.h.b16 %v265
    %v323 = vunpack.c.l.b16 %v266
    %v324 = vunpack.c.h.b16 %v266
    %v325 = vunpack.c.l.b16 %v267
    %v326 = vunpack.c.h.b16 %v267
    %v327 = vunpack.c.l.b16 %v268
    %v328 = vunpack.c.h.b16 %v268
    %v329 = vpack.c.b16 %v299, %v297
    %v330 = vpack.c.b16 %v300, %v298
    %v331 = vpack.c.b16 %v303, %v301
    %v332 = vpack.c.b16 %v304, %v302
    %v333 = vpack.c.b16 %v307, %v305
    %v334 = vpack.c.b16 %v308, %v306
    %v335 = vpack.c.b16 %v311, %v309
    %v336 = vpack.c.b16 %v312, %v310
    %v337 = vpack.c.b16 %v315, %v313
    %v338 = vpack.c.b16 %v316, %v314
    %v339 = vpack.c.b16 %v319, %v317
    %v340 = vpack.c.b16 %v320, %v318
    %v341 = vpack.c.b16 %v323, %v321
    %v342 = vpack.c.b16 %v324, %v322
    %v343 = vpack.c.b16 %v327, %v325
    %v344 = vpack.c.b16 %v328, %v326
    %361 = vmatprep.subr.bf16.mxu0 %v330
    %362 = vmatpush1.bf16.msra.mxu0 %v329
    %363 = vmatprep.subr.bf16.mxu0 %v332
    %364 = vmatpush1.bf16.msra.mxu0 %v331
    %365 = vmatprep.subr.bf16.mxu0 %v334
    %366 = vmatpush1.bf16.msra.mxu0 %v333
    %367 = vmatprep.subr.bf16.mxu0 %v336
    %368 = vmatpush1.bf16.msra.mxu0 %v335
    %369 = vmatprep.subr.bf16.mxu0 %v338
    %370 = vmatpush1.bf16.msra.mxu0 %v337
    %371 = vmatprep.subr.bf16.mxu0 %v340
    %372 = vmatpush1.bf16.msra.mxu0 %v339
    %373 = vmatprep.subr.bf16.mxu0 %v342
    %374 = vmatpush1.bf16.msra.mxu0 %v341
    %375 = vmatprep.subr.bf16.mxu0 %v344
    %376 = vmatpush1.bf16.msra.mxu0 %v343
    %377 = vmatprep.subr.bf16.mxu0 0
    %378 = vmatpush1.bf16.msra.mxu0 0
    %379 = vmatprep.subr.bf16.mxu0 0
    %380 = vmatpush1.bf16.msra.mxu0 0
    %381 = vmatprep.subr.bf16.mxu0 0
    %382 = vmatpush1.bf16.msra.mxu0 0
    %383 = vmatprep.subr.bf16.mxu0 0
    %384 = vmatpush1.bf16.msra.mxu0 0
    %385 = vmatprep.subr.bf16.mxu0 0
    %386 = vmatpush1.bf16.msra.mxu0 0
    %387 = vmatprep.subr.bf16.mxu0 0
    %388 = vmatpush1.bf16.msra.mxu0 0
    %389 = vmatprep.subr.bf16.mxu0 0
    %390 = vmatpush1.bf16.msra.mxu0 0
    %391 = vmatprep.subr.bf16.mxu0 0
    %392 = vmatpush1.bf16.msra.mxu0 0
    %393 = vmatprep.mubr.bf16.mxu0 0
    %394 = vmatmul.mubr.bf16.gmra.mrb[0].mxu0 %v252
    %v395 = vpop.f32.mrb[0].mxu0
    %v396 = vadd.f32 %v274, %v395
    %v397 = vpop.f32.mrb[0].mxu0
    %v398 = vadd.f32 %v278, %v397
    %v399 = vpop.f32.mrb[0].mxu0
    %v400 = vpop.f32.mrb[0].mxu0
    %401 = vdwg.mxu0
    %v402 = vmax.f32 %v396, 0.0
    %v403 = vmax.f32 %v398, 0.0
    %v404 = vpack.c.bf16 %v402, %v402
    %v405 = vpack.c.bf16 %v403, %v403
    %v406 = vld [vmem:[#allocation8] sm:$0xff]
    %v407 = vld [vmem:[#allocation8 + $0x8] sm:$0xff]
    %v408 = vld [vmem:[#allocation8 + $0x10] sm:$0xff]
    %v409 = vld [vmem:[#allocation8 + $0x18] sm:$0xff]
    %v410 = vld [vmem:[#allocation8 + $0x20] sm:$0xff]
    %v411 = vld [vmem:[#allocation8 + $0x28] sm:$0xff]
    %v412 = vld [vmem:[#allocation8 + $0x30] sm:$0xff]
    %v413 = vld [vmem:[#allocation8 + $0x38] sm:$0xff]
    %v414 = vld [vmem:[#allocation8 + $0x40] sm:$0xff]
    %v415 = vld [vmem:[#allocation8 + $0x48] sm:$0xff]
    %v416 = vld [vmem:[#allocation8 + $0x50] sm:$0xff]
    %v417 = vld [vmem:[#allocation8 + $0x58] sm:$0xff]
    %v418 = vld [vmem:[#allocation8 + $0x60] sm:$0xff]
    %v419 = vld [vmem:[#allocation8 + $0x68] sm:$0xff]
    %v420 = vld [vmem:[#allocation8 + $0x70] sm:$0xff]
    %v421 = vld [vmem:[#allocation8 + $0x78] sm:$0xff]
    %v422 = vld [vmem:[#allocation8 + $0x80] sm:$0xff]
    %v423 = vld [vmem:[#allocation8 + $0x88] sm:$0xff]
    %v424 = vld [vmem:[#allocation8 + $0x90] sm:$0xff]
    %v425 = vld [vmem:[#allocation8 + $0x98] sm:$0xff]
    %v426 = vld [vmem:[#allocation8 + $0xa0] sm:$0xff]
    %v427 = vld [vmem:[#allocation8 + $0xa8] sm:$0xff]
    %v428 = vld [vmem:[#allocation8 + $0xb0] sm:$0xff]
    %v429 = vld [vmem:[#allocation8 + $0xb8] sm:$0xff]
    %v430 = vld [vmem:[#allocation8 + $0xc0] sm:$0xff]
    %v431 = vld [vmem:[#allocation8 + $0xc8] sm:$0xff]
    %v432 = vld [vmem:[#allocation8 + $0xd0] sm:$0xff]
    %v433 = vld [vmem:[#allocation8 + $0xd8] sm:$0xff]
    %v434 = vld [vmem:[#allocation8 + $0xe0] sm:$0xff]
    %v435 = vld [vmem:[#allocation8 + $0xe8] sm:$0xff]
    %v436 = vld [vmem:[#allocation8 + $0xf0] sm:$0xff]
    %v437 = vld [vmem:[#allocation8 + $0xf8] sm:$0xff]
    %v438 = vld [vmem:[%s6] sm:$0x3]
    %v440 = vlaneseq
    %v441 = vshrl.u32 %v440, 7
    %v442 = vsub.s32 0, %v441
    %v443 = vrot.slane %v438, %v442
    %v444 = vlaneseq
    %v445 = vshrl.u32 %v444, 7
    %v446 = vsub.s32 1, %v445
    %v447 = vrot.slane %v438, %v446
    %v482 = vunpack.c.l.b16 %v406
    %v483 = vunpack.c.h.b16 %v406
    %v484 = vunpack.c.l.b16 %v407
    %v485 = vunpack.c.h.b16 %v407
    %v486 = vunpack.c.l.b16 %v408
    %v487 = vunpack.c.h.b16 %v408
    %v488 = vunpack.c.l.b16 %v409
    %v489 = vunpack.c.h.b16 %v409
    %v490 = vunpack.c.l.b16 %v410
    %v491 = vunpack.c.h.b16 %v410
    %v492 = vunpack.c.l.b16 %v411
    %v493 = vunpack.c.h.b16 %v411
    %v494 = vunpack.c.l.b16 %v412
    %v495 = vunpack.c.h.b16 %v412
    %v496 = vunpack.c.l.b16 %v413
    %v497 = vunpack.c.h.b16 %v413
    %v498 = vunpack.c.l.b16 %v414
    %v499 = vunpack.c.h.b16 %v414
    %v500 = vunpack.c.l.b16 %v415
    %v501 = vunpack.c.h.b16 %v415
    %v502 = vunpack.c.l.b16 %v416
    %v503 = vunpack.c.h.b16 %v416
    %v504 = vunpack.c.l.b16 %v417
    %v505 = vunpack.c.h.b16 %v417
    %v506 = vunpack.c.l.b16 %v418
    %v507 = vunpack.c.h.b16 %v418
    %v508 = vunpack.c.l.b16 %v419
    %v509 = vunpack.c.h.b16 %v419
    %v510 = vunpack.c.l.b16 %v420
    %v511 = vunpack.c.h.b16 %v420
    %v512 = vunpack.c.l.b16 %v421
    %v513 = vunpack.c.h.b16 %v421
    %v514 = vunpack.c.l.b16 %v422
    %v515 = vunpack.c.h.b16 %v422
    %v516 = vunpack.c.l.b16 %v423
    %v517 = vunpack.c.h.b16 %v423
    %v518 = vunpack.c.l.b16 %v424
    %v519 = vunpack.c.h.b16 %v424
    %v520 = vunpack.c.l.b16 %v425
    %v521 = vunpack.c.h.b16 %v425
    %v522 = vunpack.c.l.b16 %v426
    %v523 = vunpack.c.h.b16 %v426
    %v524 = vunpack.c.l.b16 %v427
    %v525 = vunpack.c.h.b16 %v427
    %v526 = vunpack.c.l.b16 %v428
    %v527 = vunpack.c.h.b16 %v428
    %v528 = vunpack.c.l.b16 %v429
    %v529 = vunpack.c.h.b16 %v429
    %v530 = vunpack.c.l.b16 %v430
    %v531 = vunpack.c.h.b16 %v430
    %v532 = vunpack.c.l.b16 %v431
    %v533 = vunpack.c.h.b16 %v431
    %v534 = vunpack.c.l.b16 %v432
    %v535 = vunpack.c.h.b16 %v432
    %v536 = vunpack.c.l.b16 %v433
    %v537 = vunpack.c.h.b16 %v433
    %v538 = vunpack.c.l.b16 %v434
    %v539 = vunpack.c.h.b16 %v434
    %v540 = vunpack.c.l.b16 %v435
    %v541 = vunpack.c.h.b16 %v435
    %v542 = vunpack.c.l.b16 %v436
    %v543 = vunpack.c.h.b16 %v436
    %v544 = vunpack.c.l.b16 %v437
    %v545 = vunpack.c.h.b16 %v437
    %v546 = vpack.c.b16 %v484, %v482
    %v547 = vpack.c.b16 %v485, %v483
    %v548 = vpack.c.b16 %v488, %v486
    %v549 = vpack.c.b16 %v489, %v487
    %v550 = vpack.c.b16 %v492, %v490
    %v551 = vpack.c.b16 %v493, %v491
    %v552 = vpack.c.b16 %v496, %v494
    %v553 = vpack.c.b16 %v497, %v495
    %v554 = vpack.c.b16 %v500, %v498
    %v555 = vpack.c.b16 %v501, %v499
    %v556 = vpack.c.b16 %v504, %v502
    %v557 = vpack.c.b16 %v505, %v503
    %v558 = vpack.c.b16 %v508, %v506
    %v559 = vpack.c.b16 %v509, %v507
    %v560 = vpack.c.b16 %v512, %v510
    %v561 = vpack.c.b16 %v513, %v511
    %v562 = vpack.c.b16 %v516, %v514
    %v563 = vpack.c.b16 %v517, %v515
    %v564 = vpack.c.b16 %v520, %v518
    %v565 = vpack.c.b16 %v521, %v519
    %v566 = vpack.c.b16 %v524, %v522
    %v567 = vpack.c.b16 %v525, %v523
    %v568 = vpack.c.b16 %v528, %v526
    %v569 = vpack.c.b16 %v529, %v527
    %v570 = vpack.c.b16 %v532, %v530
    %v571 = vpack.c.b16 %v533, %v531
    %v572 = vpack.c.b16 %v536, %v534
    %v573 = vpack.c.b16 %v537, %v535
    %v574 = vpack.c.b16 %v540, %v538
    %v575 = vpack.c.b16 %v541, %v539
    %v576 = vpack.c.b16 %v544, %v542
    %v577 = vpack.c.b16 %v545, %v543
    %610 = vmatprep.subr.bf16.mxu0 %v547
    %611 = vmatpush1.bf16.msra.mxu0 %v546
    %612 = vmatprep.subr.bf16.mxu0 %v549
    %613 = vmatpush1.bf16.msra.mxu0 %v548
    %614 = vmatprep.subr.bf16.mxu0 %v551
    %615 = vmatpush1.bf16.msra.mxu0 %v550
    %616 = vmatprep.subr.bf16.mxu0 %v553
    %617 = vmatpush1.bf16.msra.mxu0 %v552
    %618 = vmatprep.subr.bf16.mxu0 %v555
    %619 = vmatpush1.bf16.msra.mxu0 %v554
    %620 = vmatprep.subr.bf16.mxu0 %v557
    %621 = vmatpush1.bf16.msra.mxu0 %v556
    %622 = vmatprep.subr.bf16.mxu0 %v559
    %623 = vmatpush1.bf16.msra.mxu0 %v558
    %624 = vmatprep.subr.bf16.mxu0 %v561
    %625 = vmatpush1.bf16.msra.mxu0 %v560
    %626 = vmatprep.subr.bf16.mxu0 %v563
    %627 = vmatpush1.bf16.msra.mxu0 %v562
    %628 = vmatprep.subr.bf16.mxu0 %v565
    %629 = vmatpush1.bf16.msra.mxu0 %v564
    %630 = vmatprep.subr.bf16.mxu0 %v567
    %631 = vmatpush1.bf16.msra.mxu0 %v566
    %632 = vmatprep.subr.bf16.mxu0 %v569
    %633 = vmatpush1.bf16.msra.mxu0 %v568
    %634 = vmatprep.subr.bf16.mxu0 %v571
    %635 = vmatpush1.bf16.msra.mxu0 %v570
    %636 = vmatprep.subr.bf16.mxu0 %v573
    %637 = vmatpush1.bf16.msra.mxu0 %v572
    %638 = vmatprep.subr.bf16.mxu0 %v575
    %639 = vmatpush1.bf16.msra.mxu0 %v574
    %640 = vmatprep.subr.bf16.mxu0 %v577
    %641 = vmatpush1.bf16.msra.mxu0 %v576
    %642 = vmatprep.mubr.bf16.mxu0 %v405
    %643 = vmatmul.mubr.bf16.gmra.mrb[0].mxu0 %v404
    %v644 = vpop.f32.mrb[0].mxu0
    %v645 = vadd.f32 %v443, %v644
    %v646 = vpop.f32.mrb[0].mxu0
    %v647 = vadd.f32 %v447, %v646
    %v648 = vpop.f32.mrb[0].mxu0
    %v649 = vpop.f32.mrb[0].mxu0
    %650 = vdwg.mxu0
    %v651 = vmax.f32 %v645, 0.0
    %v652 = vmax.f32 %v647, 0.0
    %v653 = vpack.c.bf16 %v651, %v651
    %v654 = vpack.c.bf16 %v652, %v652
    %v655 = vld [vmem:[#allocation10] sm:$0xff]
    %v656 = vld [vmem:[#allocation10 + $0x8] sm:$0xff]
    %v657 = vld [vmem:[#allocation10 + $0x10] sm:$0xff]
    %v658 = vld [vmem:[#allocation10 + $0x18] sm:$0xff]
    %v659 = vld [vmem:[#allocation10 + $0x20] sm:$0xff]
    %v660 = vld [vmem:[#allocation10 + $0x28] sm:$0xff]
    %v661 = vld [vmem:[#allocation10 + $0x30] sm:$0xff]
    %v662 = vld [vmem:[#allocation10 + $0x38] sm:$0xff]
    %v663 = vld [vmem:[#allocation10 + $0x40] sm:$0xff]
    %v664 = vld [vmem:[#allocation10 + $0x48] sm:$0xff]
    %v665 = vld [vmem:[#allocation10 + $0x50] sm:$0xff]
    %v666 = vld [vmem:[#allocation10 + $0x58] sm:$0xff]
    %v667 = vld [vmem:[#allocation10 + $0x60] sm:$0xff]
    %v668 = vld [vmem:[#allocation10 + $0x68] sm:$0xff]
    %v669 = vld [vmem:[#allocation10 + $0x70] sm:$0xff]
    %v670 = vld [vmem:[#allocation10 + $0x78] sm:$0xff]
    %v671 = vld [vmem:[#allocation10 + $0x80] sm:$0xff]
    %v672 = vld [vmem:[#allocation10 + $0x88] sm:$0xff]
    %v673 = vld [vmem:[#allocation10 + $0x90] sm:$0xff]
    %v674 = vld [vmem:[#allocation10 + $0x98] sm:$0xff]
    %v675 = vld [vmem:[#allocation10 + $0xa0] sm:$0xff]
    %v676 = vld [vmem:[#allocation10 + $0xa8] sm:$0xff]
    %v677 = vld [vmem:[#allocation10 + $0xb0] sm:$0xff]
    %v678 = vld [vmem:[#allocation10 + $0xb8] sm:$0xff]
    %v679 = vld [vmem:[#allocation10 + $0xc0] sm:$0xff]
    %v680 = vld [vmem:[#allocation10 + $0xc8] sm:$0xff]
    %v681 = vld [vmem:[#allocation10 + $0xd0] sm:$0xff]
    %v682 = vld [vmem:[#allocation10 + $0xd8] sm:$0xff]
    %v683 = vld [vmem:[#allocation10 + $0xe0] sm:$0xff]
    %v684 = vld [vmem:[#allocation10 + $0xe8] sm:$0xff]
    %v685 = vld [vmem:[#allocation10 + $0xf0] sm:$0xff]
    %v686 = vld [vmem:[#allocation10 + $0xf8] sm:$0xff]
    %v687 = vld [vmem:[%s8] sm:$0x3]
    %v689 = vlaneseq
    %v690 = vshrl.u32 %v689, 7
    %v691 = vsub.s32 0, %v690
    %v692 = vrot.slane %v687, %v691
    %v693 = vlaneseq
    %v694 = vshrl.u32 %v693, 7
    %v695 = vsub.s32 1, %v694
    %v696 = vrot.slane %v687, %v695
    %v731 = vunpack.c.l.b16 %v655
    %v732 = vunpack.c.h.b16 %v655
    %v733 = vunpack.c.l.b16 %v656
    %v734 = vunpack.c.h.b16 %v656
    %v735 = vunpack.c.l.b16 %v657
    %v736 = vunpack.c.h.b16 %v657
    %v737 = vunpack.c.l.b16 %v658
    %v738 = vunpack.c.h.b16 %v658
    %v739 = vunpack.c.l.b16 %v659
    %v740 = vunpack.c.h.b16 %v659
    %v741 = vunpack.c.l.b16 %v660
    %v742 = vunpack.c.h.b16 %v660
    %v743 = vunpack.c.l.b16 %v661
    %v744 = vunpack.c.h.b16 %v661
    %v745 = vunpack.c.l.b16 %v662
    %v746 = vunpack.c.h.b16 %v662
    %v747 = vunpack.c.l.b16 %v663
    %v748 = vunpack.c.h.b16 %v663
    %v749 = vunpack.c.l.b16 %v664
    %v750 = vunpack.c.h.b16 %v664
    %v751 = vunpack.c.l.b16 %v665
    %v752 = vunpack.c.h.b16 %v665
    %v753 = vunpack.c.l.b16 %v666
    %v754 = vunpack.c.h.b16 %v666
    %v755 = vunpack.c.l.b16 %v667
    %v756 = vunpack.c.h.b16 %v667
    %v757 = vunpack.c.l.b16 %v668
    %v758 = vunpack.c.h.b16 %v668
    %v759 = vunpack.c.l.b16 %v669
    %v760 = vunpack.c.h.b16 %v669
    %v761 = vunpack.c.l.b16 %v670
    %v762 = vunpack.c.h.b16 %v670
    %v763 = vunpack.c.l.b16 %v671
    %v764 = vunpack.c.h.b16 %v671
    %v765 = vunpack.c.l.b16 %v672
    %v766 = vunpack.c.h.b16 %v672
    %v767 = vunpack.c.l.b16 %v673
    %v768 = vunpack.c.h.b16 %v673
    %v769 = vunpack.c.l.b16 %v674
    %v770 = vunpack.c.h.b16 %v674
    %v771 = vunpack.c.l.b16 %v675
    %v772 = vunpack.c.h.b16 %v675
    %v773 = vunpack.c.l.b16 %v676
    %v774 = vunpack.c.h.b16 %v676
    %v775 = vunpack.c.l.b16 %v677
    %v776 = vunpack.c.h.b16 %v677
    %v777 = vunpack.c.l.b16 %v678
    %v778 = vunpack.c.h.b16 %v678
    %v779 = vunpack.c.l.b16 %v679
    %v780 = vunpack.c.h.b16 %v679
    %v781 = vunpack.c.l.b16 %v680
    %v782 = vunpack.c.h.b16 %v680
    %v783 = vunpack.c.l.b16 %v681
    %v784 = vunpack.c.h.b16 %v681
    %v785 = vunpack.c.l.b16 %v682
    %v786 = vunpack.c.h.b16 %v682
    %v787 = vunpack.c.l.b16 %v683
    %v788 = vunpack.c.h.b16 %v683
    %v789 = vunpack.c.l.b16 %v684
    %v790 = vunpack.c.h.b16 %v684
    %v791 = vunpack.c.l.b16 %v685
    %v792 = vunpack.c.h.b16 %v685
    %v793 = vunpack.c.l.b16 %v686
    %v794 = vunpack.c.h.b16 %v686
    %v795 = vpack.c.b16 %v733, %v731
    %v796 = vpack.c.b16 %v734, %v732
    %v797 = vpack.c.b16 %v737, %v735
    %v798 = vpack.c.b16 %v738, %v736
    %v799 = vpack.c.b16 %v741, %v739
    %v800 = vpack.c.b16 %v742, %v740
    %v801 = vpack.c.b16 %v745, %v743
    %v802 = vpack.c.b16 %v746, %v744
    %v803 = vpack.c.b16 %v749, %v747
    %v804 = vpack.c.b16 %v750, %v748
    %v805 = vpack.c.b16 %v753, %v751
    %v806 = vpack.c.b16 %v754, %v752
    %v807 = vpack.c.b16 %v757, %v755
    %v808 = vpack.c.b16 %v758, %v756
    %v809 = vpack.c.b16 %v761, %v759
    %v810 = vpack.c.b16 %v762, %v760
    %v811 = vpack.c.b16 %v765, %v763
    %v812 = vpack.c.b16 %v766, %v764
    %v813 = vpack.c.b16 %v769, %v767
    %v814 = vpack.c.b16 %v770, %v768
    %v815 = vpack.c.b16 %v773, %v771
    %v816 = vpack.c.b16 %v774, %v772
    %v817 = vpack.c.b16 %v777, %v775
    %v818 = vpack.c.b16 %v778, %v776
    %v819 = vpack.c.b16 %v781, %v779
    %v820 = vpack.c.b16 %v782, %v780
    %v821 = vpack.c.b16 %v785, %v783
    %v822 = vpack.c.b16 %v786, %v784
    %v823 = vpack.c.b16 %v789, %v787
    %v824 = vpack.c.b16 %v790, %v788
    %v825 = vpack.c.b16 %v793, %v791
    %v826 = vpack.c.b16 %v794, %v792
    %859 = vmatprep.subr.bf16.mxu0 %v796
    %860 = vmatpush1.bf16.msra.mxu0 %v795
    %861 = vmatprep.subr.bf16.mxu0 %v798
    %862 = vmatpush1.bf16.msra.mxu0 %v797
    %863 = vmatprep.subr.bf16.mxu0 %v800
    %864 = vmatpush1.bf16.msra.mxu0 %v799
    %865 = vmatprep.subr.bf16.mxu0 %v802
    %866 = vmatpush1.bf16.msra.mxu0 %v801
    %867 = vmatprep.subr.bf16.mxu0 %v804
    %868 = vmatpush1.bf16.msra.mxu0 %v803
    %869 = vmatprep.subr.bf16.mxu0 %v806
    %870 = vmatpush1.bf16.msra.mxu0 %v805
    %871 = vmatprep.subr.bf16.mxu0 %v808
    %872 = vmatpush1.bf16.msra.mxu0 %v807
    %873 = vmatprep.subr.bf16.mxu0 %v810
    %874 = vmatpush1.bf16.msra.mxu0 %v809
    %875 = vmatprep.subr.bf16.mxu0 %v812
    %876 = vmatpush1.bf16.msra.mxu0 %v811
    %877 = vmatprep.subr.bf16.mxu0 %v814
    %878 = vmatpush1.bf16.msra.mxu0 %v813
    %879 = vmatprep.subr.bf16.mxu0 %v816
    %880 = vmatpush1.bf16.msra.mxu0 %v815
    %881 = vmatprep.subr.bf16.mxu0 %v818
    %882 = vmatpush1.bf16.msra.mxu0 %v817
    %883 = vmatprep.subr.bf16.mxu0 %v820
    %884 = vmatpush1.bf16.msra.mxu0 %v819
    %885 = vmatprep.subr.bf16.mxu0 %v822
    %886 = vmatpush1.bf16.msra.mxu0 %v821
    %887 = vmatprep.subr.bf16.mxu0 %v824
    %888 = vmatpush1.bf16.msra.mxu0 %v823
    %889 = vmatprep.subr.bf16.mxu0 %v826
    %890 = vmatpush1.bf16.msra.mxu0 %v825
    %891 = vmatprep.mubr.bf16.mxu0 %v654
    %892 = vmatmul.mubr.bf16.gmra.mrb[0].mxu0 %v653
    %v893 = vpop.f32.mrb[0].mxu0
    %v894 = vadd.f32 %v692, %v893
    %v895 = vpop.f32.mrb[0].mxu0
    %v896 = vadd.f32 %v696, %v895
    %v897 = vpop.f32.mrb[0].mxu0
    %v898 = vpop.f32.mrb[0].mxu0
    %899 = vdwg.mxu0
    %v900 = vmax.f32 %v894, 0.0
    %v901 = vmax.f32 %v896, 0.0
    %v902 = vpack.c.bf16 %v900, %v900
    %v903 = vpack.c.bf16 %v901, %v901
    %v904 = vld [vmem:[#allocation11] sm:$0xf]
    %v905 = vld [vmem:[#allocation11 + $0x4] sm:$0xf]
    %v906 = vld [vmem:[#allocation11 + $0x8] sm:$0xf]
    %v907 = vld [vmem:[#allocation11 + $0xc] sm:$0xf]
    %v908 = vld [vmem:[#allocation11 + $0x10] sm:$0xf]
    %v909 = vld [vmem:[#allocation11 + $0x14] sm:$0xf]
    %v910 = vld [vmem:[#allocation11 + $0x18] sm:$0xf]
    %v911 = vld [vmem:[#allocation11 + $0x1c] sm:$0xf]
    %v912 = vld [vmem:[#allocation11 + $0x20] sm:$0xf]
    %v913 = vld [vmem:[#allocation11 + $0x24] sm:$0xf]
    %v914 = vld [vmem:[#allocation11 + $0x28] sm:$0xf]
    %v915 = vld [vmem:[#allocation11 + $0x2c] sm:$0xf]
    %v916 = vld [vmem:[#allocation11 + $0x30] sm:$0xf]
    %v917 = vld [vmem:[#allocation11 + $0x34] sm:$0xf]
    %v918 = vld [vmem:[#allocation11 + $0x38] sm:$0xf]
    %v919 = vld [vmem:[#allocation11 + $0x3c] sm:$0xf]
    %v920 = vld [vmem:[#allocation11 + $0x40] sm:$0xf]
    %v921 = vld [vmem:[#allocation11 + $0x44] sm:$0xf]
    %v922 = vld [vmem:[#allocation11 + $0x48] sm:$0xf]
    %v923 = vld [vmem:[#allocation11 + $0x4c] sm:$0xf]
    %v924 = vld [vmem:[#allocation11 + $0x50] sm:$0xf]
    %v925 = vld [vmem:[#allocation11 + $0x54] sm:$0xf]
    %v926 = vld [vmem:[#allocation11 + $0x58] sm:$0xf]
    %v927 = vld [vmem:[#allocation11 + $0x5c] sm:$0xf]
    %v928 = vld [vmem:[#allocation11 + $0x60] sm:$0xf]
    %v929 = vld [vmem:[#allocation11 + $0x64] sm:$0xf]
    %v930 = vld [vmem:[#allocation11 + $0x68] sm:$0xf]
    %v931 = vld [vmem:[#allocation11 + $0x6c] sm:$0xf]
    %v932 = vld [vmem:[#allocation11 + $0x70] sm:$0xf]
    %v933 = vld [vmem:[#allocation11 + $0x74] sm:$0xf]
    %v934 = vld [vmem:[#allocation11 + $0x78] sm:$0xf]
    %v935 = vld [vmem:[#allocation11 + $0x7c] sm:$0xf]
    %v936 = vld [vmem:[%s10] sm:$0x1]
    %v938 = vlaneseq
    %v939 = vshrl.u32 %v938, 7
    %v940 = vsub.s32 0, %v939
    %v941 = vrot.slane %v936, %v940
    %v975 = vunpack.c.l.b16 %v904
    %v976 = vunpack.c.l.b16 %v905
    %v977 = vunpack.c.l.b16 %v906
    %v978 = vunpack.c.l.b16 %v907
    %v979 = vunpack.c.l.b16 %v908
    %v980 = vunpack.c.l.b16 %v909
    %v981 = vunpack.c.l.b16 %v910
    %v982 = vunpack.c.l.b16 %v911
    %v983 = vunpack.c.l.b16 %v912
    %v984 = vunpack.c.l.b16 %v913
    %v985 = vunpack.c.l.b16 %v914
    %v986 = vunpack.c.l.b16 %v915
    %v987 = vunpack.c.l.b16 %v916
    %v988 = vunpack.c.l.b16 %v917
    %v989 = vunpack.c.l.b16 %v918
    %v990 = vunpack.c.l.b16 %v919
    %v991 = vunpack.c.l.b16 %v920
    %v992 = vunpack.c.l.b16 %v921
    %v993 = vunpack.c.l.b16 %v922
    %v994 = vunpack.c.l.b16 %v923
    %v995 = vunpack.c.l.b16 %v924
    %v996 = vunpack.c.l.b16 %v925
    %v997 = vunpack.c.l.b16 %v926
    %v998 = vunpack.c.l.b16 %v927
    %v999 = vunpack.c.l.b16 %v928
    %v1000 = vunpack.c.l.b16 %v929
    %v1001 = vunpack.c.l.b16 %v930
    %v1002 = vunpack.c.l.b16 %v931
    %v1003 = vunpack.c.l.b16 %v932
    %v1004 = vunpack.c.l.b16 %v933
    %v1005 = vunpack.c.l.b16 %v934
    %v1006 = vunpack.c.l.b16 %v935
    %v1007 = vpack.c.b16 %v976, %v975
    %v1008 = vpack.c.b16 %v978, %v977
    %v1009 = vpack.c.b16 %v980, %v979
    %v1010 = vpack.c.b16 %v982, %v981
    %v1011 = vpack.c.b16 %v984, %v983
    %v1012 = vpack.c.b16 %v986, %v985
    %v1013 = vpack.c.b16 %v988, %v987
    %v1014 = vpack.c.b16 %v990, %v989
    %v1015 = vpack.c.b16 %v992, %v991
    %v1016 = vpack.c.b16 %v994, %v993
    %v1017 = vpack.c.b16 %v996, %v995
    %v1018 = vpack.c.b16 %v998, %v997
    %v1019 = vpack.c.b16 %v1000, %v999
    %v1020 = vpack.c.b16 %v1002, %v1001
    %v1021 = vpack.c.b16 %v1004, %v1003
    %v1022 = vpack.c.b16 %v1006, %v1005
    %1039 = vmatprep.subr.bf16.mxu0 0
    %1040 = vmatpush1.bf16.msra.mxu0 %v1007
    %1041 = vmatprep.subr.bf16.mxu0 0
    %1042 = vmatpush1.bf16.msra.mxu0 %v1008
    %1043 = vmatprep.subr.bf16.mxu0 0
    %1044 = vmatpush1.bf16.msra.mxu0 %v1009
    %1045 = vmatprep.subr.bf16.mxu0 0
    %1046 = vmatpush1.bf16.msra.mxu0 %v1010
    %1047 = vmatprep.subr.bf16.mxu0 0
    %1048 = vmatpush1.bf16.msra.mxu0 %v1011
    %1049 = vmatprep.subr.bf16.mxu0 0
    %1050 = vmatpush1.bf16.msra.mxu0 %v1012
    %1051 = vmatprep.subr.bf16.mxu0 0
    %1052 = vmatpush1.bf16.msra.mxu0 %v1013
    %1053 = vmatprep.subr.bf16.mxu0 0
    %1054 = vmatpush1.bf16.msra.mxu0 %v1014
    %1055 = vmatprep.subr.bf16.mxu0 0
    %1056 = vmatpush1.bf16.msra.mxu0 %v1015
    %1057 = vmatprep.subr.bf16.mxu0 0
    %1058 = vmatpush1.bf16.msra.mxu0 %v1016
    %1059 = vmatprep.subr.bf16.mxu0 0
    %1060 = vmatpush1.bf16.msra.mxu0 %v1017
    %1061 = vmatprep.subr.bf16.mxu0 0
    %1062 = vmatpush1.bf16.msra.mxu0 %v1018
    %1063 = vmatprep.subr.bf16.mxu0 0
    %1064 = vmatpush1.bf16.msra.mxu0 %v1019
    %1065 = vmatprep.subr.bf16.mxu0 0
    %1066 = vmatpush1.bf16.msra.mxu0 %v1020
    %1067 = vmatprep.subr.bf16.mxu0 0
    %1068 = vmatpush1.bf16.msra.mxu0 %v1021
    %1069 = vmatprep.subr.bf16.mxu0 0
    %1070 = vmatpush1.bf16.msra.mxu0 %v1022
    %1071 = vmatprep.mubr.bf16.mxu0 %v903
    %1072 = vmatmul.mubr.bf16.gmra.mrb[0].mxu0 %v902
    %v1073 = vpop.f32.mrb[0].mxu0
    %v1074 = vadd.f32 %v941, %v1073
    %v1075 = vpop.f32.mrb[0].mxu0
    %v1076 = vpop.f32.mrb[0].mxu0
    %v1077 = vpop.f32.mrb[0].mxu0
    %1078 = vdwg.mxu0
    %v1079 = vmax.f32 %v1074, 0.0
    %v1080 = vpack.c.bf16 %v1079, %v1079
    %v1081 = vld [vmem:[#allocation13] sm:$0xf]
    %v1082 = vld [vmem:[#allocation13 + $0x4] sm:$0xf]
    %v1083 = vld [vmem:[#allocation13 + $0x8] sm:$0xf]
    %v1084 = vld [vmem:[#allocation13 + $0xc] sm:$0xf]
    %v1085 = vld [vmem:[#allocation13 + $0x10] sm:$0xf]
    %v1086 = vld [vmem:[#allocation13 + $0x14] sm:$0xf]
    %v1087 = vld [vmem:[#allocation13 + $0x18] sm:$0xf]
    %v1088 = vld [vmem:[#allocation13 + $0x1c] sm:$0xf]
    %v1089 = vld [vmem:[#allocation13 + $0x20] sm:$0xf]
    %v1090 = vld [vmem:[#allocation13 + $0x24] sm:$0xf]
    %v1091 = vld [vmem:[#allocation13 + $0x28] sm:$0xf]
    %v1092 = vld [vmem:[#allocation13 + $0x2c] sm:$0xf]
    %v1093 = vld [vmem:[#allocation13 + $0x30] sm:$0xf]
    %v1094 = vld [vmem:[#allocation13 + $0x34] sm:$0xf]
    %v1095 = vld [vmem:[#allocation13 + $0x38] sm:$0xf]
    %v1096 = vld [vmem:[#allocation13 + $0x3c] sm:$0xf]
    %v1097 = vld [vmem:[%s12] sm:$0x1]
    %v1099 = vlaneseq
    %v1100 = vshrl.u32 %v1099, 7
    %v1101 = vsub.s32 0, %v1100
    %v1102 = vrot.slane %v1097, %v1101
    %v1120 = vunpack.c.l.b16 %v1081
    %v1121 = vunpack.c.l.b16 %v1082
    %v1122 = vunpack.c.l.b16 %v1083
    %v1123 = vunpack.c.l.b16 %v1084
    %v1124 = vunpack.c.l.b16 %v1085
    %v1125 = vunpack.c.l.b16 %v1086
    %v1126 = vunpack.c.l.b16 %v1087
    %v1127 = vunpack.c.l.b16 %v1088
    %v1128 = vunpack.c.l.b16 %v1089
    %v1129 = vunpack.c.l.b16 %v1090
    %v1130 = vunpack.c.l.b16 %v1091
    %v1131 = vunpack.c.l.b16 %v1092
    %v1132 = vunpack.c.l.b16 %v1093
    %v1133 = vunpack.c.l.b16 %v1094
    %v1134 = vunpack.c.l.b16 %v1095
    %v1135 = vunpack.c.l.b16 %v1096
    %v1136 = vpack.c.b16 %v1121, %v1120
    %v1137 = vpack.c.b16 %v1123, %v1122
    %v1138 = vpack.c.b16 %v1125, %v1124
    %v1139 = vpack.c.b16 %v1127, %v1126
    %v1140 = vpack.c.b16 %v1129, %v1128
    %v1141 = vpack.c.b16 %v1131, %v1130
    %v1142 = vpack.c.b16 %v1133, %v1132
    %v1143 = vpack.c.b16 %v1135, %v1134
    %1152 = vmatprep.subr.bf16.mxu0 0
    %1153 = vmatpush1.bf16.msra.mxu0 %v1136
    %1154 = vmatprep.subr.bf16.mxu0 0
    %1155 = vmatpush1.bf16.msra.mxu0 %v1137
    %1156 = vmatprep.subr.bf16.mxu0 0
    %1157 = vmatpush1.bf16.msra.mxu0 %v1138
    %1158 = vmatprep.subr.bf16.mxu0 0
    %1159 = vmatpush1.bf16.msra.mxu0 %v1139
    %1160 = vmatprep.subr.bf16.mxu0 0
    %1161 = vmatpush1.bf16.msra.mxu0 %v1140
    %1162 = vmatprep.subr.bf16.mxu0 0
    %1163 = vmatpush1.bf16.msra.mxu0 %v1141
    %1164 = vmatprep.subr.bf16.mxu0 0
    %1165 = vmatpush1.bf16.msra.mxu0 %v1142
    %1166 = vmatprep.subr.bf16.mxu0 0
    %1167 = vmatpush1.bf16.msra.mxu0 %v1143
    %1168 = vmatprep.subr.bf16.mxu0 0
    %1169 = vmatpush1.bf16.msra.mxu0 0
    %1170 = vmatprep.subr.bf16.mxu0 0
    %1171 = vmatpush1.bf16.msra.mxu0 0
    %1172 = vmatprep.subr.bf16.mxu0 0
    %1173 = vmatpush1.bf16.msra.mxu0 0
    %1174 = vmatprep.subr.bf16.mxu0 0
    %1175 = vmatpush1.bf16.msra.mxu0 0
    %1176 = vmatprep.subr.bf16.mxu0 0
    %1177 = vmatpush1.bf16.msra.mxu0 0
    %1178 = vmatprep.subr.bf16.mxu0 0
    %1179 = vmatpush1.bf16.msra.mxu0 0
    %1180 = vmatprep.subr.bf16.mxu0 0
    %1181 = vmatpush1.bf16.msra.mxu0 0
    %1182 = vmatprep.subr.bf16.mxu0 0
    %1183 = vmatpush1.bf16.msra.mxu0 0
    %1184 = vmatprep.mubr.bf16.mxu0 0
    %1185 = vmatmul.mubr.bf16.gmra.mrb[0].mxu0 %v1080
    %v1186 = vpop.f32.mrb[0].mxu0
    %v1187 = vadd.f32 %v1102, %v1186
    %v1188 = vpop.f32.mrb[0].mxu0
    %v1189 = vpop.f32.mrb[0].mxu0
    %v1190 = vpop.f32.mrb[0].mxu0
    %1191 = vdwg.mxu0
    %1192 = vst [vmem:[#allocation14] sm:$0xff] %v1187
    // Predicated region
    $region82: #{tpu_custom_call.1} parent=1 // pred_check
      _
    $region83: #{tpu_custom_call.1} parent=1 // pred_check_branch
      %1194 = sbr.rel (0) target = $region85
    $region84: #{tpu_custom_call.1} parent=1 // pred_region
      %s1196 = ssub.s32 128, 128
      %1197 = vsyncadd [#allocation4], %s1196
      %s1199 = sshll.u32 [#allocation14], 4
      %s1200 = int_to_ptr.vmem [resolvable:$true] %s1199
      %1202 = dma.vmem_to_hbm [thread:$0]  %s1200, 128, %s13, [#allocation4]
    $region85: #{tpu_custom_call.1} parent=1 // pred_fallthru
      _
    // Predicated region
    $region86: #{tpu_custom_call.1} parent=1 // pred_check
      _
    $region87: #{tpu_custom_call.1} parent=1 // pred_check_branch
      %1204 = sbr.rel (0) target = $region89
    $region88: #{tpu_custom_call.1} parent=1 // pred_region
      %1205 = dma.done [#allocation4], 128
    $region89: #{tpu_custom_call.1} parent=1 // pred_fallthru
      _
    %1206 = vsyncpa [#allocation3], 1
    %1207 = vsyncpa [#allocation6], 1
    %1208 = vsyncpa [#allocation9], 1
    %1209 = vsyncpa [#allocation12], 1
    %1210 = vsyncpa [#allocation4], 1

</llo_original>
